<compile_context>
chip_gen: v7x
topology: tpu7x:2x2x1
jax: 0.10.0
libtpu: 0.0.40
codegen_flags: <defaults>
</compile_context>

<pallas_src>
import math
import jax
import jax.numpy as jnp
from jax.experimental import pallas as pl
from jax.experimental.pallas import tpu as pltpu


def _round_up(x, m):
    return (x + m - 1) // m * m


# --------------------------------------------------------------------------- #
# Kernel
# --------------------------------------------------------------------------- #
def lstm_cell_kernel(xh_ref, cx_ref, w_ref, b_ref, hy_ref, cy_ref):
    Hp = hy_ref.shape[1]          # lane-aligned (multiple of 128) hidden width

    # One MXU contraction over K = Ip + Hp (merged x2h + h2h), bf16 in, f32 acc.
    gates = (
        jnp.dot(xh_ref[...], w_ref[...], preferred_element_type=jnp.float32)
        + b_ref[...]
    )

    # Lane-aligned gate slices (Hp % 128 == 0) -> free, no relayout.
    ingate     = jax.nn.sigmoid(gates[:, 0 * Hp:1 * Hp])
    forgetgate = jax.nn.sigmoid(gates[:, 1 * Hp:2 * Hp])
    cellgate   = jnp.tanh(gates[:, 2 * Hp:3 * Hp])
    outgate    = jax.nn.sigmoid(gates[:, 3 * Hp:4 * Hp])

    # Elementwise gate math in float32 (native VPU/EUP path on all generations).
    cy = cx_ref[...] * forgetgate + ingate * cellgate
    hy = outgate * jnp.tanh(cy)

    cy_ref[...] = cy.astype(cy_ref.dtype)
    hy_ref[...] = hy.astype(hy_ref.dtype)


# --------------------------------------------------------------------------- #
# Parameter prep: fold biases, lane-pad each gate, fuse Wx/Wh, cast to bf16
# --------------------------------------------------------------------------- #
def prepare_params(wx, bx, wh, bh, compute_dtype=jnp.bfloat16):
    """wx: (I, 4H), wh: (H, 4H), bx/bh: (1, 4H)  (weights already transposed).

    Returns:
      w: (Ip + Hp, 4*Hp) in `compute_dtype`   -- [Wx ; Wh], gate order [i|f|g|o]
      b: (1, 4*Hp) float32                    -- bx + bh
    where Ip = round_up(I, 128), Hp = round_up(H, 128).
    """
    I, four_h = wx.shape
    H = four_h // 4
    Ip = _round_up(I, 128)
    Hp = _round_up(H, 128)

    def pad_gate_axis(a):                      # (K, 4H) -> (K, 4*Hp)
        K = a.shape[0]
        a = a.reshape(K, 4, H)
        a = jnp.pad(a, ((0, 0), (0, 0), (0, Hp - H)))
        return a.reshape(K, 4 * Hp)

    wx_p = jnp.pad(pad_gate_axis(wx.astype(jnp.float32)), ((0, Ip - I), (0, 0)))
    wh_p = jnp.pad(pad_gate_axis(wh.astype(jnp.float32)), ((0, Hp - H), (0, 0)))
    w = jnp.concatenate([wx_p, wh_p], axis=0).astype(compute_dtype)
    b = pad_gate_axis((bx + bh).astype(jnp.float32))
    return w, b


# --------------------------------------------------------------------------- #
# Wrapper
# --------------------------------------------------------------------------- #
def lstm_cell(x, hx, cx, w, b, *, tb=256):
    """Single LSTM cell step.

    x:  (B, input_size)   hx, cx: (B, hidden_size)
    w:  (Ip+Hp, 4*Hp) bf16 fused weight (from prepare_params)
    b:  (1, 4*Hp) f32 fused bias
    returns (hy, cy) each (B, hidden_size), dtype of x.
    """
    B, I = x.shape
    H = hx.shape[1]
    out_dtype = x.dtype

    Hp = b.shape[1] // 4
    Ip = w.shape[0] - Hp
    K = Ip + Hp

    # Pad batch to a multiple of the (sublane-aligned) batch tile and features
    # to their lane-aligned widths.  Python-level ifs: no-ops when aligned.
    Bp = _round_up(B, 8)
    tb = min(tb, Bp)
    Bp = _round_up(Bp, tb)

    if (Bp, Ip) != (B, I):
        x = jnp.pad(x, ((0, Bp - B), (0, Ip - I)))
    if (Bp, Hp) != (B, H):
        hx = jnp.pad(hx, ((0, Bp - B), (0, Hp - H)))
        cx = jnp.pad(cx, ((0, Bp - B), (0, Hp - H)))

    # Merged matmul input [x | hx] in bf16 -> one K = Ip+Hp MXU contraction.
    xh = jnp.concatenate([x, hx], axis=1).astype(w.dtype)
    cx = cx.astype(jnp.float32)

    grid = (Bp // tb,)

    # Weight/bias VMEM footprint here is tiny (< 1 MiB); for large I/H, bound
    # resident weights + double-buffered activation tiles with
    # pltpu.CompilerParams(vmem_limit_bytes=...) (<= ~48 MiB on v7x's 64 MiB VMEM).
    hy, cy = pl.pallas_call(
        lstm_cell_kernel,
        out_shape=(
            jax.ShapeDtypeStruct((Bp, Hp), out_dtype),
            jax.ShapeDtypeStruct((Bp, Hp), out_dtype),
        ),
        grid=grid,
        in_specs=[
            pl.BlockSpec((tb, K), lambda i: (i, 0)),        # [x|hx] batch tile
            pl.BlockSpec((tb, Hp), lambda i: (i, 0)),       # cx batch tile
            pl.BlockSpec((K, 4 * Hp), lambda i: (0, 0)),    # fused W, VMEM-resident
            pl.BlockSpec((1, 4 * Hp), lambda i: (0, 0)),    # fused bias, resident
        ],
        out_specs=(
            pl.BlockSpec((tb, Hp), lambda i: (i, 0)),
            pl.BlockSpec((tb, Hp), lambda i: (i, 0)),
        ),
        compiler_params=pltpu.CompilerParams(
            # Batch tiles are independent -> megacore-shard on v7x (2 TCs).
            dimension_semantics=("parallel",),
        ),
    )(xh, cx, w, b)

    if (Bp, Hp) != (B, H):
        hy = hy[:B, :H]
        cy = cy[:B, :H]
    return hy, cy


# --------------------------------------------------------------------------- #
# Init + pure-JAX reference (mirrors the PyTorch module)
# --------------------------------------------------------------------------- #
def init_params(key, input_size, hidden_size, dtype=jnp.float32):
    std = 1.0 / math.sqrt(hidden_size)
    k1, k2, k3, k4 = jax.random.split(key, 4)
    # nn.Linear stores weight as (out, in); we pre-transpose for the kernel.
    wx = jax.random.uniform(k1, (4 * hidden_size, input_size), dtype, -std, std).T
    bx = jax.random.uniform(k2, (1, 4 * hidden_size), dtype, -std, std)
    wh = jax.random.uniform(k3, (4 * hidden_size, hidden_size), dtype, -std, std).T
    bh = jax.random.uniform(k4, (1, 4 * hidden_size), dtype, -std, std)
    return wx, bx, wh, bh


def lstm_cell_ref(x, hx, cx, wx, bx, wh, bh):
    """Pure-JAX float32 reference mirroring the PyTorch forward."""
    gates = x @ wx + bx + hx @ wh + bh
    i, f, g, o = jnp.split(gates, 4, axis=1)
    i, f, g, o = jax.nn.sigmoid(i), jax.nn.sigmoid(f), jnp.tanh(g), jax.nn.sigmoid(o)
    cy = cx * f + i * g
    hy = o * jnp.tanh(cy)
    return hy, cy


# --------------------------------------------------------------------------- #
if __name__ == "__main__":
    key = jax.random.PRNGKey(0)

    def run_case(key, B, INPUT, HIDDEN):
        kx, kh, kc, kp = jax.random.split(key, 4)
        x = jax.random.normal(kx, (B, INPUT), jnp.float32)
        hx = jax.random.normal(kh, (B, HIDDEN), jnp.float32)
        cx = jax.random.normal(kc, (B, HIDDEN), jnp.float32)
        wx, bx, wh, bh = init_params(kp, INPUT, HIDDEN)

        w, b = prepare_params(wx, bx, wh, bh)              # bf16 fused weights
        hy, cy = lstm_cell(x, hx, cx, w, b)
        jax.block_until_ready((hy, cy))

        hy_ref, cy_ref = lstm_cell_ref(x, hx, cx, wx, bx, wh, bh)
        # bf16 weight/activation quantization in the kernel -> loosened tolerance.
        assert hy.shape == (B, HIDDEN) and cy.shape == (B, HIDDEN)
        assert jnp.allclose(hy, hy_ref, atol=2e-2, rtol=2e-2), "hy mismatch"
        assert jnp.allclose(cy, cy_ref, atol=2e-2, rtol=2e-2), "cy mismatch"

    k1, k2 = jax.random.split(key)
    run_case(k1, B=8, INPUT=128, HIDDEN=128)   # lane-aligned sizes (fast path)
    run_case(k2, B=5, INPUT=20, HIDDEN=32)     # unaligned sizes (padding path)

    print("KERNEL_OK")
</pallas_src>

<mosaic_0001>
module attributes {stable_mosaic.version = 11 : i64} {
  func.func @lstm_cell_kernel(%arg0: i32, %arg1: memref<8x256xbf16, #tpu.memory_space<vmem>>, %arg2: memref<8x128xf32, #tpu.memory_space<vmem>>, %arg3: memref<256x512xbf16, #tpu.memory_space<vmem>>, %arg4: memref<1x512xf32, #tpu.memory_space<vmem>>, %arg5: memref<8x128xf32, #tpu.memory_space<vmem>>, %arg6: memref<8x128xf32, #tpu.memory_space<vmem>>) attributes {dimension_semantics = [#tpu.dimension_semantics<parallel>], iteration_bounds = array<i64: 1>, scalar_prefetch = 0 : i64, scratch_operands = 0 : i64, tpu.core_type = #tpu.core_type<tc>, window_params = [{transform_indices = @transform_0, window_bounds = array<i64: 8, 256>}, {transform_indices = @transform_1, window_bounds = array<i64: 8, 128>}, {pipeline_mode = #tpu.pipeline_mode<synchronous>, transform_indices = @transform_2, window_bounds = array<i64: 256, 512>}, {pipeline_mode = #tpu.pipeline_mode<synchronous>, transform_indices = @transform_3, window_bounds = array<i64: 1, 512>}, {transform_indices = @transform_4, window_bounds = array<i64: 8, 128>}, {transform_indices = @transform_5, window_bounds = array<i64: 8, 128>}]} {
    %c0 = arith.constant 0 : index
    %c0_0 = arith.constant 0 : index
    %0 = vector.load %arg1[%c0, %c0_0] : memref<8x256xbf16, #tpu.memory_space<vmem>>, vector<8x256xbf16>
    %c0_1 = arith.constant 0 : index
    %c0_2 = arith.constant 0 : index
    %1 = vector.load %arg3[%c0_1, %c0_2] : memref<256x512xbf16, #tpu.memory_space<vmem>>, vector<256x512xbf16>
    %cst = arith.constant dense<0.000000e+00> : vector<8x512xf32>
    %2 = tpu.matmul %0, %1, %cst {dimension_numbers = #tpu.dot_dimension_numbers<[1], [0], [0], [1], [0, 0, 1, 1], [], []>} : vector<8x256xbf16>, vector<256x512xbf16>, vector<8x512xf32> -> vector<8x512xf32>
    %c0_3 = arith.constant 0 : index
    %c0_4 = arith.constant 0 : index
    %3 = vector.load %arg4[%c0_3, %c0_4] : memref<1x512xf32, #tpu.memory_space<vmem>>, vector<1x512xf32>
    %4 = vector.broadcast %3 : vector<1x512xf32> to vector<8x512xf32>
    %5 = arith.addf %2, %4 : vector<8x512xf32>
    %6 = vector.extract_strided_slice %5 {offsets = [0, 0], sizes = [8, 128], strides = [1, 1]} : vector<8x512xf32> to vector<8x128xf32>
    %7 = arith.negf %6 : vector<8x128xf32>
    %8 = math.exp %7 : vector<8x128xf32>
    %cst_5 = arith.constant 1.000000e+00 : f32
    %9 = vector.broadcast %cst_5 : f32 to vector<8x128xf32>
    %10 = arith.addf %9, %8 : vector<8x128xf32>
    %11 = arith.divf %9, %10 : vector<8x128xf32>
    %12 = vector.extract_strided_slice %5 {offsets = [0, 128], sizes = [8, 128], strides = [1, 1]} : vector<8x512xf32> to vector<8x128xf32>
    %13 = arith.negf %12 : vector<8x128xf32>
    %14 = math.exp %13 : vector<8x128xf32>
    %cst_6 = arith.constant 1.000000e+00 : f32
    %15 = vector.broadcast %cst_6 : f32 to vector<8x128xf32>
    %16 = arith.addf %15, %14 : vector<8x128xf32>
    %17 = arith.divf %15, %16 : vector<8x128xf32>
    %18 = vector.extract_strided_slice %5 {offsets = [0, 256], sizes = [8, 128], strides = [1, 1]} : vector<8x512xf32> to vector<8x128xf32>
    %19 = math.tanh %18 : vector<8x128xf32>
    %20 = vector.extract_strided_slice %5 {offsets = [0, 384], sizes = [8, 128], strides = [1, 1]} : vector<8x512xf32> to vector<8x128xf32>
    %21 = arith.negf %20 : vector<8x128xf32>
    %22 = math.exp %21 : vector<8x128xf32>
    %cst_7 = arith.constant 1.000000e+00 : f32
    %23 = vector.broadcast %cst_7 : f32 to vector<8x128xf32>
    %24 = arith.addf %23, %22 : vector<8x128xf32>
    %25 = arith.divf %23, %24 : vector<8x128xf32>
    %c0_8 = arith.constant 0 : index
    %c0_9 = arith.constant 0 : index
    %26 = vector.load %arg2[%c0_8, %c0_9] : memref<8x128xf32, #tpu.memory_space<vmem>>, vector<8x128xf32>
    %27 = arith.mulf %26, %17 : vector<8x128xf32>
    %28 = arith.mulf %11, %19 : vector<8x128xf32>
    %29 = arith.addf %27, %28 : vector<8x128xf32>
    %30 = math.tanh %29 : vector<8x128xf32>
    %31 = arith.mulf %25, %30 : vector<8x128xf32>
    %c0_10 = arith.constant 0 : index
    %c0_11 = arith.constant 0 : index
    %32 = vector.load %arg6[%c0_10, %c0_11] : memref<8x128xf32, #tpu.memory_space<vmem>>, vector<8x128xf32>
    tpu.vector_store %arg6[%c0_10, %c0_11], %29 {strides = array<i32>} : memref<8x128xf32, #tpu.memory_space<vmem>>, vector<8x128xf32>,
    %c0_12 = arith.constant 0 : index
    %c0_13 = arith.constant 0 : index
    %33 = vector.load %arg5[%c0_12, %c0_13] : memref<8x128xf32, #tpu.memory_space<vmem>>, vector<8x128xf32>
    tpu.vector_store %arg5[%c0_12, %c0_13], %31 {strides = array<i32>} : memref<8x128xf32, #tpu.memory_space<vmem>>, vector<8x128xf32>,
    return
  }
  func.func @transform_0(%arg0: i32) -> (i32, i32) {
    %c0_i32 = arith.constant 0 : i32
    %c0_i32_0 = arith.constant 0 : i32
    return %arg0, %c0_i32 : i32, i32
  }
  func.func @transform_1(%arg0: i32) -> (i32, i32) {
    %c0_i32 = arith.constant 0 : i32
    %c0_i32_0 = arith.constant 0 : i32
    return %arg0, %c0_i32 : i32, i32
  }
  func.func @transform_2(%arg0: i32) -> (i32, i32) {
    %c0_i32 = arith.constant 0 : i32
    %c0_i32_0 = arith.constant 0 : i32
    %c0_i32_1 = arith.constant 0 : i32
    return %c0_i32, %c0_i32_0 : i32, i32
  }
  func.func @transform_3(%arg0: i32) -> (i32, i32) {
    %c0_i32 = arith.constant 0 : i32
    %c0_i32_0 = arith.constant 0 : i32
    %c0_i32_1 = arith.constant 0 : i32
    return %c0_i32, %c0_i32_0 : i32, i32
  }
  func.func @transform_4(%arg0: i32) -> (i32, i32) {
    %c0_i32 = arith.constant 0 : i32
    %c0_i32_0 = arith.constant 0 : i32
    return %arg0, %c0_i32 : i32, i32
  }
  func.func @transform_5(%arg0: i32) -> (i32, i32) {
    %c0_i32 = arith.constant 0 : i32
    %c0_i32_0 = arith.constant 0 : i32
    return %arg0, %c0_i32 : i32, i32
  }
}

</mosaic_0001>

<llo_original>
// kernel: tpu_custom_call.1
$region0: #{tpu_custom_call.1}
  #allocation0 [shape = 'u32[]', space=smem, size = 0x4, offset = 0x4, fixed_abs, tag = 'smem constant byte address 0x4 - core index']
  #allocation1 [shape = 'u32[144,128]{1,0:T(1,128)}', space=vmem, size = 0x12000, scoped, tag = 'internal scratch']
  %s0 = inlined_call_operand.hbm [shape: bf16[8,256], index: 0, kind: input, shape index: {}]
  %s1 = inlined_call_operand.hbm [shape: f32[8,128], index: 1, kind: input, shape index: {}]
  %s2 = inlined_call_operand.hbm [shape: bf16[256,512], index: 2, kind: input, shape index: {}]
  %s3 = inlined_call_operand.vmem [shape: f32[1,512], index: 3, kind: input, shape index: {}]
  %s4 = inlined_call_operand.hbm [shape: f32[8,128], index: 4, kind: output, shape index: {0}]
  %s5 = inlined_call_operand.hbm [shape: f32[8,128], index: 5, kind: output, shape index: {1}]
  %6 = xla_tuple %s4, %s5
  %s7 = sld [smem:[#allocation0]]
  $region46: #{tpu_custom_call.1} parent=0
    _
  %s9 = ssub.s32 1, %s7
  %s10 = scalar_select 0, %s9, %s7
  $region1: #{tpu_custom_call.1} parent=0
    #allocation2 [shape = 'u8[4096]{0}', space=vmem, size = 0x1000, scoped, tag = 'input window, operand 0, single buffered']
    #allocation3 [shape = 's32[1]{0}', space=sflag, size = 0x4, scoped, tag = 'scoped memory for tpu_custom_call.1']
    #allocation4 [shape = 's32[1]{0}', space=sflag, size = 0x4, scoped, tag = 'scoped memory for tpu_custom_call.1']
    #allocation5 [shape = 'u8[4096]{0}', space=vmem, size = 0x1000, scoped, tag = 'input window, operand 1, single buffered']
    #allocation6 [shape = 's32[1]{0}', space=sflag, size = 0x4, scoped, tag = 'scoped memory for tpu_custom_call.1']
    #allocation7 [shape = 'u8[262144]{0}', space=vmem, size = 0x40000, scoped, tag = 'input window, operand 2, single buffered']
    #allocation8 [shape = 'u8[4096]{0}', space=vmem, size = 0x1000, scoped, tag = 'output window, operand 0, single buffered']
    #allocation9 [shape = 'u8[4096]{0}', space=vmem, size = 0x1000, scoped, tag = 'output window, operand 1, single buffered']
    #allocation10 [shape = 's32[1]{0}', space=sflag, size = 0x4, scoped, tag = 'scoped memory for tpu_custom_call.1']
    %11 = vsyncpa [#allocation3], 0
    %12 = vsyncpa [#allocation6], 0
    %13 = vsyncpa [#allocation4], 0
    %14 = vsyncpa [#allocation10], 0
    // Predicated region
    $region2: #{tpu_custom_call.1} parent=1 // pred_check
      _
    $region3: #{tpu_custom_call.1} parent=1 // pred_check_branch
      %16 = sbr.rel (0) target = $region5
    $region4: #{tpu_custom_call.1} parent=1 // pred_region
      %s18 = ssub.s32 128, 128
      %19 = vsyncadd [#allocation3], %s18
      %s21 = sshll.u32 [#allocation2], 4
      %s22 = int_to_ptr.vmem [resolvable:$true] %s21
      %24 = dma.hbm_to_vmem [thread:$0]  %s0, 128, %s22, [#allocation3]
    $region5: #{tpu_custom_call.1} parent=1 // pred_fallthru
      _
    // Predicated region
    $region6: #{tpu_custom_call.1} parent=1 // pred_check
      _
    $region7: #{tpu_custom_call.1} parent=1 // pred_check_branch
      %26 = sbr.rel (0) target = $region9
    $region8: #{tpu_custom_call.1} parent=1 // pred_region
      %s28 = ssub.s32 128, 128
      %29 = vsyncadd [#allocation6], %s28
      %s31 = sshll.u32 [#allocation5], 4
      %s32 = int_to_ptr.vmem [resolvable:$true] %s31
      %34 = dma.hbm_to_vmem [thread:$0]  %s1, 128, %s32, [#allocation6]
    $region9: #{tpu_custom_call.1} parent=1 // pred_fallthru
      _
    // Predicated region
    $region10: #{tpu_custom_call.1} parent=1 // pred_check
      _
    $region11: #{tpu_custom_call.1} parent=1 // pred_check_branch
      %36 = sbr.rel (0) target = $region13
    $region12: #{tpu_custom_call.1} parent=1 // pred_region
      %s38 = ssub.s32 8192, 8192
      %39 = vsyncadd [#allocation6], %s38
      %s40 = sshll.u32 [#allocation7], 4
      %s41 = int_to_ptr.vmem [resolvable:$true] %s40
      %46 = dma.hbm_to_vmem [thread:$0]  %s2, 8192, %s41, [#allocation6], 256, 256, 16
    $region13: #{tpu_custom_call.1} parent=1 // pred_fallthru
      _
    // Predicated region
    $region14: #{tpu_custom_call.1} parent=1 // pred_check
      _
    $region15: #{tpu_custom_call.1} parent=1 // pred_check_branch
      %48 = sbr.rel (0) target = $region17
    $region16: #{tpu_custom_call.1} parent=1 // pred_region
      _
    $region17: #{tpu_custom_call.1} parent=1 // pred_fallthru
      _
    // Predicated region
    $region18: #{tpu_custom_call.1} parent=1 // pred_check
      _
    $region19: #{tpu_custom_call.1} parent=1 // pred_check_branch
      %50 = sbr.rel (0) target = $region21
    $region20: #{tpu_custom_call.1} parent=1 // pred_region
      %51 = dma.done [#allocation3], 128
    $region21: #{tpu_custom_call.1} parent=1 // pred_fallthru
      _
    // Predicated region
    $region22: #{tpu_custom_call.1} parent=1 // pred_check
      _
    $region23: #{tpu_custom_call.1} parent=1 // pred_check_branch
      %53 = sbr.rel (0) target = $region25
    $region24: #{tpu_custom_call.1} parent=1 // pred_region
      %54 = dma.done [#allocation6], 128
    $region25: #{tpu_custom_call.1} parent=1 // pred_fallthru
      _
    // Predicated region
    $region26: #{tpu_custom_call.1} parent=1 // pred_check
      _
    $region27: #{tpu_custom_call.1} parent=1 // pred_check_branch
      %56 = sbr.rel (0) target = $region29
    $region28: #{tpu_custom_call.1} parent=1 // pred_region
      %57 = dma.done [#allocation6], 8192
    $region29: #{tpu_custom_call.1} parent=1 // pred_fallthru
      _
    %v58 = vld [vmem:[#allocation2] sm:$0xff]
    %v59 = vld [vmem:[#allocation7] sm:$0xff]
    %v60 = vld [vmem:[#allocation7 + $0x8] sm:$0xff]
    %v61 = vld [vmem:[#allocation7 + $0x10] sm:$0xff]
    %v62 = vld [vmem:[#allocation7 + $0x18] sm:$0xff]
    %v63 = vld [vmem:[#allocation7 + $0x20] sm:$0xff]
    %v64 = vld [vmem:[#allocation7 + $0x28] sm:$0xff]
    %v65 = vld [vmem:[#allocation7 + $0x30] sm:$0xff]
    %v66 = vld [vmem:[#allocation7 + $0x38] sm:$0xff]
    %v67 = vld [vmem:[#allocation7 + $0x40] sm:$0xff]
    %v68 = vld [vmem:[#allocation7 + $0x48] sm:$0xff]
    %v69 = vld [vmem:[#allocation7 + $0x50] sm:$0xff]
    %v70 = vld [vmem:[#allocation7 + $0x58] sm:$0xff]
    %v71 = vld [vmem:[#allocation7 + $0x60] sm:$0xff]
    %v72 = vld [vmem:[#allocation7 + $0x68] sm:$0xff]
    %v73 = vld [vmem:[#allocation7 + $0x70] sm:$0xff]
    %v74 = vld [vmem:[#allocation7 + $0x78] sm:$0xff]
    %v75 = vld [vmem:[#allocation7 + $0x80] sm:$0xff]
    %v76 = vld [vmem:[#allocation7 + $0x88] sm:$0xff]
    %v77 = vld [vmem:[#allocation7 + $0x90] sm:$0xff]
    %v78 = vld [vmem:[#allocation7 + $0x98] sm:$0xff]
    %v79 = vld [vmem:[#allocation7 + $0xa0] sm:$0xff]
    %v80 = vld [vmem:[#allocation7 + $0xa8] sm:$0xff]
    %v81 = vld [vmem:[#allocation7 + $0xb0] sm:$0xff]
    %v82 = vld [vmem:[#allocation7 + $0xb8] sm:$0xff]
    %v83 = vld [vmem:[#allocation7 + $0xc0] sm:$0xff]
    %v84 = vld [vmem:[#allocation7 + $0xc8] sm:$0xff]
    %v85 = vld [vmem:[#allocation7 + $0xd0] sm:$0xff]
    %v86 = vld [vmem:[#allocation7 + $0xd8] sm:$0xff]
    %v87 = vld [vmem:[#allocation7 + $0xe0] sm:$0xff]
    %v88 = vld [vmem:[#allocation7 + $0xe8] sm:$0xff]
    %v89 = vld [vmem:[#allocation7 + $0xf0] sm:$0xff]
    %v90 = vld [vmem:[#allocation7 + $0xf8] sm:$0xff]
    %v91 = vld [vmem:[#allocation7 + $0x100] sm:$0xff]
    %v92 = vld [vmem:[#allocation7 + $0x108] sm:$0xff]
    %v93 = vld [vmem:[#allocation7 + $0x110] sm:$0xff]
    %v94 = vld [vmem:[#allocation7 + $0x118] sm:$0xff]
    %v95 = vld [vmem:[#allocation7 + $0x120] sm:$0xff]
    %v96 = vld [vmem:[#allocation7 + $0x128] sm:$0xff]
    %v97 = vld [vmem:[#allocation7 + $0x130] sm:$0xff]
    %v98 = vld [vmem:[#allocation7 + $0x138] sm:$0xff]
    %v99 = vld [vmem:[#allocation7 + $0x140] sm:$0xff]
    %v100 = vld [vmem:[#allocation7 + $0x148] sm:$0xff]
    %v101 = vld [vmem:[#allocation7 + $0x150] sm:$0xff]
    %v102 = vld [vmem:[#allocation7 + $0x158] sm:$0xff]
    %v103 = vld [vmem:[#allocation7 + $0x160] sm:$0xff]
    %v104 = vld [vmem:[#allocation7 + $0x168] sm:$0xff]
    %v105 = vld [vmem:[#allocation7 + $0x170] sm:$0xff]
    %v106 = vld [vmem:[#allocation7 + $0x178] sm:$0xff]
    %v107 = vld [vmem:[#allocation7 + $0x180] sm:$0xff]
    %v108 = vld [vmem:[#allocation7 + $0x188] sm:$0xff]
    %v109 = vld [vmem:[#allocation7 + $0x190] sm:$0xff]
    %v110 = vld [vmem:[#allocation7 + $0x198] sm:$0xff]
    %v111 = vld [vmem:[#allocation7 + $0x1a0] sm:$0xff]
    %v112 = vld [vmem:[#allocation7 + $0x1a8] sm:$0xff]
    %v113 = vld [vmem:[#allocation7 + $0x1b0] sm:$0xff]
    %v114 = vld [vmem:[#allocation7 + $0x1b8] sm:$0xff]
    %v115 = vld [vmem:[#allocation7 + $0x1c0] sm:$0xff]
    %v116 = vld [vmem:[#allocation7 + $0x1c8] sm:$0xff]
    %v117 = vld [vmem:[#allocation7 + $0x1d0] sm:$0xff]
    %v118 = vld [vmem:[#allocation7 + $0x1d8] sm:$0xff]
    %v119 = vld [vmem:[#allocation7 + $0x1e0] sm:$0xff]
    %v120 = vld [vmem:[#allocation7 + $0x1e8] sm:$0xff]
    %v121 = vld [vmem:[#allocation7 + $0x1f0] sm:$0xff]
    %v122 = vld [vmem:[#allocation7 + $0x1f8] sm:$0xff]
    %v123 = vld [vmem:[%s3] sm:$0xf]
    %v125 = vlaneseq
    %v126 = vshrl.u32 %v125, 7
    %v127 = vsub.s32 0, %v126
    %v128 = vrot.slane %v123, %v127
    %v129 = vlaneseq
    %v130 = vshrl.u32 %v129, 7
    %v131 = vsub.s32 1, %v130
    %v132 = vrot.slane %v123, %v131
    %v133 = vlaneseq
    %v134 = vshrl.u32 %v133, 7
    %v135 = vsub.s32 2, %v134
    %v136 = vrot.slane %v123, %v135
    %v137 = vlaneseq
    %v138 = vshrl.u32 %v137, 7
    %v139 = vsub.s32 3, %v138
    %v140 = vrot.slane %v123, %v139
    %v146 = vunpack.c.l.b16 %v58
    %v147 = vunpack.c.h.b16 %v58
    %v148 = vpack.c.b16 %v146, %v146
    %v149 = vpack.c.b16 %v147, %v147
    %v216 = vunpack.c.l.b16 %v59
    %v217 = vunpack.c.h.b16 %v59
    %v218 = vunpack.c.l.b16 %v60
    %v219 = vunpack.c.h.b16 %v60
    %v220 = vunpack.c.l.b16 %v61
    %v221 = vunpack.c.h.b16 %v61
    %v222 = vunpack.c.l.b16 %v62
    %v223 = vunpack.c.h.b16 %v62
    %v224 = vunpack.c.l.b16 %v63
    %v225 = vunpack.c.h.b16 %v63
    %v226 = vunpack.c.l.b16 %v64
    %v227 = vunpack.c.h.b16 %v64
    %v228 = vunpack.c.l.b16 %v65
    %v229 = vunpack.c.h.b16 %v65
    %v230 = vunpack.c.l.b16 %v66
    %v231 = vunpack.c.h.b16 %v66
    %v232 = vunpack.c.l.b16 %v67
    %v233 = vunpack.c.h.b16 %v67
    %v234 = vunpack.c.l.b16 %v68
    %v235 = vunpack.c.h.b16 %v68
    %v236 = vunpack.c.l.b16 %v69
    %v237 = vunpack.c.h.b16 %v69
    %v238 = vunpack.c.l.b16 %v70
    %v239 = vunpack.c.h.b16 %v70
    %v240 = vunpack.c.l.b16 %v71
    %v241 = vunpack.c.h.b16 %v71
    %v242 = vunpack.c.l.b16 %v72
    %v243 = vunpack.c.h.b16 %v72
    %v244 = vunpack.c.l.b16 %v73
    %v245 = vunpack.c.h.b16 %v73
    %v246 = vunpack.c.l.b16 %v74
    %v247 = vunpack.c.h.b16 %v74
    %v248 = vunpack.c.l.b16 %v75
    %v249 = vunpack.c.h.b16 %v75
    %v250 = vunpack.c.l.b16 %v76
    %v251 = vunpack.c.h.b16 %v76
    %v252 = vunpack.c.l.b16 %v77
    %v253 = vunpack.c.h.b16 %v77
    %v254 = vunpack.c.l.b16 %v78
    %v255 = vunpack.c.h.b16 %v78
    %v256 = vunpack.c.l.b16 %v79
    %v257 = vunpack.c.h.b16 %v79
    %v258 = vunpack.c.l.b16 %v80
    %v259 = vunpack.c.h.b16 %v80
    %v260 = vunpack.c.l.b16 %v81
    %v261 = vunpack.c.h.b16 %v81
    %v262 = vunpack.c.l.b16 %v82
    %v263 = vunpack.c.h.b16 %v82
    %v264 = vunpack.c.l.b16 %v83
    %v265 = vunpack.c.h.b16 %v83
    %v266 = vunpack.c.l.b16 %v84
    %v267 = vunpack.c.h.b16 %v84
    %v268 = vunpack.c.l.b16 %v85
    %v269 = vunpack.c.h.b16 %v85
    %v270 = vunpack.c.l.b16 %v86
    %v271 = vunpack.c.h.b16 %v86
    %v272 = vunpack.c.l.b16 %v87
    %v273 = vunpack.c.h.b16 %v87
    %v274 = vunpack.c.l.b16 %v88
    %v275 = vunpack.c.h.b16 %v88
    %v276 = vunpack.c.l.b16 %v89
    %v277 = vunpack.c.h.b16 %v89
    %v278 = vunpack.c.l.b16 %v90
    %v279 = vunpack.c.h.b16 %v90
    %v280 = vunpack.c.l.b16 %v91
    %v281 = vunpack.c.h.b16 %v91
    %v282 = vunpack.c.l.b16 %v92
    %v283 = vunpack.c.h.b16 %v92
    %v284 = vunpack.c.l.b16 %v93
    %v285 = vunpack.c.h.b16 %v93
    %v286 = vunpack.c.l.b16 %v94
    %v287 = vunpack.c.h.b16 %v94
    %v288 = vunpack.c.l.b16 %v95
    %v289 = vunpack.c.h.b16 %v95
    %v290 = vunpack.c.l.b16 %v96
    %v291 = vunpack.c.h.b16 %v96
    %v292 = vunpack.c.l.b16 %v97
    %v293 = vunpack.c.h.b16 %v97
    %v294 = vunpack.c.l.b16 %v98
    %v295 = vunpack.c.h.b16 %v98
    %v296 = vunpack.c.l.b16 %v99
    %v297 = vunpack.c.h.b16 %v99
    %v298 = vunpack.c.l.b16 %v100
    %v299 = vunpack.c.h.b16 %v100
    %v300 = vunpack.c.l.b16 %v101
    %v301 = vunpack.c.h.b16 %v101
    %v302 = vunpack.c.l.b16 %v102
    %v303 = vunpack.c.h.b16 %v102
    %v304 = vunpack.c.l.b16 %v103
    %v305 = vunpack.c.h.b16 %v103
    %v306 = vunpack.c.l.b16 %v104
    %v307 = vunpack.c.h.b16 %v104
    %v308 = vunpack.c.l.b16 %v105
    %v309 = vunpack.c.h.b16 %v105
    %v310 = vunpack.c.l.b16 %v106
    %v311 = vunpack.c.h.b16 %v106
    %v312 = vunpack.c.l.b16 %v107
    %v313 = vunpack.c.h.b16 %v107
    %v314 = vunpack.c.l.b16 %v108
    %v315 = vunpack.c.h.b16 %v108
    %v316 = vunpack.c.l.b16 %v109
    %v317 = vunpack.c.h.b16 %v109
    %v318 = vunpack.c.l.b16 %v110
    %v319 = vunpack.c.h.b16 %v110
    %v320 = vunpack.c.l.b16 %v111
    %v321 = vunpack.c.h.b16 %v111
    %v322 = vunpack.c.l.b16 %v112
    %v323 = vunpack.c.h.b16 %v112
    %v324 = vunpack.c.l.b16 %v113
    %v325 = vunpack.c.h.b16 %v113
    %v326 = vunpack.c.l.b16 %v114
    %v327 = vunpack.c.h.b16 %v114
    %v328 = vunpack.c.l.b16 %v115
    %v329 = vunpack.c.h.b16 %v115
    %v330 = vunpack.c.l.b16 %v116
    %v331 = vunpack.c.h.b16 %v116
    %v332 = vunpack.c.l.b16 %v117
    %v333 = vunpack.c.h.b16 %v117
    %v334 = vunpack.c.l.b16 %v118
    %v335 = vunpack.c.h.b16 %v118
    %v336 = vunpack.c.l.b16 %v119
    %v337 = vunpack.c.h.b16 %v119
    %v338 = vunpack.c.l.b16 %v120
    %v339 = vunpack.c.h.b16 %v120
    %v340 = vunpack.c.l.b16 %v121
    %v341 = vunpack.c.h.b16 %v121
    %v342 = vunpack.c.l.b16 %v122
    %v343 = vunpack.c.h.b16 %v122
    %v344 = vpack.c.b16 %v220, %v216
    %v345 = vpack.c.b16 %v221, %v217
    %v346 = vpack.c.b16 %v222, %v218
    %v347 = vpack.c.b16 %v223, %v219
    %v348 = vpack.c.b16 %v228, %v224
    %v349 = vpack.c.b16 %v229, %v225
    %v350 = vpack.c.b16 %v230, %v226
    %v351 = vpack.c.b16 %v231, %v227
    %v352 = vpack.c.b16 %v236, %v232
    %v353 = vpack.c.b16 %v237, %v233
    %v354 = vpack.c.b16 %v238, %v234
    %v355 = vpack.c.b16 %v239, %v235
    %v356 = vpack.c.b16 %v244, %v240
    %v357 = vpack.c.b16 %v245, %v241
    %v358 = vpack.c.b16 %v246, %v242
    %v359 = vpack.c.b16 %v247, %v243
    %v360 = vpack.c.b16 %v252, %v248
    %v361 = vpack.c.b16 %v253, %v249
    %v362 = vpack.c.b16 %v254, %v250
    %v363 = vpack.c.b16 %v255, %v251
    %v364 = vpack.c.b16 %v260, %v256
    %v365 = vpack.c.b16 %v261, %v257
    %v366 = vpack.c.b16 %v262, %v258
    %v367 = vpack.c.b16 %v263, %v259
    %v368 = vpack.c.b16 %v268, %v264
    %v369 = vpack.c.b16 %v269, %v265
    %v370 = vpack.c.b16 %v270, %v266
    %v371 = vpack.c.b16 %v271, %v267
    %v372 = vpack.c.b16 %v276, %v272
    %v373 = vpack.c.b16 %v277, %v273
    %v374 = vpack.c.b16 %v278, %v274
    %v375 = vpack.c.b16 %v279, %v275
    %v376 = vpack.c.b16 %v284, %v280
    %v377 = vpack.c.b16 %v285, %v281
    %v378 = vpack.c.b16 %v286, %v282
    %v379 = vpack.c.b16 %v287, %v283
    %v380 = vpack.c.b16 %v292, %v288
    %v381 = vpack.c.b16 %v293, %v289
    %v382 = vpack.c.b16 %v294, %v290
    %v383 = vpack.c.b16 %v295, %v291
    %v384 = vpack.c.b16 %v300, %v296
    %v385 = vpack.c.b16 %v301, %v297
    %v386 = vpack.c.b16 %v302, %v298
    %v387 = vpack.c.b16 %v303, %v299
    %v388 = vpack.c.b16 %v308, %v304
    %v389 = vpack.c.b16 %v309, %v305
    %v390 = vpack.c.b16 %v310, %v306
    %v391 = vpack.c.b16 %v311, %v307
    %v392 = vpack.c.b16 %v316, %v312
    %v393 = vpack.c.b16 %v317, %v313
    %v394 = vpack.c.b16 %v318, %v314
    %v395 = vpack.c.b16 %v319, %v315
    %v396 = vpack.c.b16 %v324, %v320
    %v397 = vpack.c.b16 %v325, %v321
    %v398 = vpack.c.b16 %v326, %v322
    %v399 = vpack.c.b16 %v327, %v323
    %v400 = vpack.c.b16 %v332, %v328
    %v401 = vpack.c.b16 %v333, %v329
    %v402 = vpack.c.b16 %v334, %v330
    %v403 = vpack.c.b16 %v335, %v331
    %v404 = vpack.c.b16 %v340, %v336
    %v405 = vpack.c.b16 %v341, %v337
    %v406 = vpack.c.b16 %v342, %v338
    %v407 = vpack.c.b16 %v343, %v339
    %472 = vmatprep.subr.bf16.mxu0 %v345
    %473 = vmatpush1.bf16.msra.mxu0 %v344
    %474 = vmatprep.subr.bf16.mxu0 %v349
    %475 = vmatpush1.bf16.msra.mxu0 %v348
    %476 = vmatprep.subr.bf16.mxu0 %v353
    %477 = vmatpush1.bf16.msra.mxu0 %v352
    %478 = vmatprep.subr.bf16.mxu0 %v357
    %479 = vmatpush1.bf16.msra.mxu0 %v356
    %480 = vmatprep.subr.bf16.mxu0 %v361
    %481 = vmatpush1.bf16.msra.mxu0 %v360
    %482 = vmatprep.subr.bf16.mxu0 %v365
    %483 = vmatpush1.bf16.msra.mxu0 %v364
    %484 = vmatprep.subr.bf16.mxu0 %v369
    %485 = vmatpush1.bf16.msra.mxu0 %v368
    %486 = vmatprep.subr.bf16.mxu0 %v373
    %487 = vmatpush1.bf16.msra.mxu0 %v372
    %488 = vmatprep.subr.bf16.mxu0 %v377
    %489 = vmatpush1.bf16.msra.mxu0 %v376
    %490 = vmatprep.subr.bf16.mxu0 %v381
    %491 = vmatpush1.bf16.msra.mxu0 %v380
    %492 = vmatprep.subr.bf16.mxu0 %v385
    %493 = vmatpush1.bf16.msra.mxu0 %v384
    %494 = vmatprep.subr.bf16.mxu0 %v389
    %495 = vmatpush1.bf16.msra.mxu0 %v388
    %496 = vmatprep.subr.bf16.mxu0 %v393
    %497 = vmatpush1.bf16.msra.mxu0 %v392
    %498 = vmatprep.subr.bf16.mxu0 %v397
    %499 = vmatpush1.bf16.msra.mxu0 %v396
    %500 = vmatprep.subr.bf16.mxu0 %v401
    %501 = vmatpush1.bf16.msra.mxu0 %v400
    %502 = vmatprep.subr.bf16.mxu0 %v405
    %503 = vmatpush1.bf16.msra.mxu0 %v404
    %504 = vmatprep.mubr.bf16.mxu0 %v149
    %505 = vmatmul.mubr.bf16.gmra.mrb[0].mxu0 %v148
    %v506 = vpop.f32.mrb[0].mxu0
    %v507 = vadd.f32 %v128, %v506
    %v508 = vpop.f32.mrb[0].mxu0
    %v509 = vadd.f32 %v132, %v508
    %v510 = vpop.f32.mrb[0].mxu0
    %v511 = vpop.f32.mrb[0].mxu0
    %512 = vdwg.mxu0
    %513 = vmatprep.subr.bf16.mxu0 %v347
    %514 = vmatpush1.bf16.msra.mxu0 %v346
    %515 = vmatprep.subr.bf16.mxu0 %v351
    %516 = vmatpush1.bf16.msra.mxu0 %v350
    %517 = vmatprep.subr.bf16.mxu0 %v355
    %518 = vmatpush1.bf16.msra.mxu0 %v354
    %519 = vmatprep.subr.bf16.mxu0 %v359
    %520 = vmatpush1.bf16.msra.mxu0 %v358
    %521 = vmatprep.subr.bf16.mxu0 %v363
    %522 = vmatpush1.bf16.msra.mxu0 %v362
    %523 = vmatprep.subr.bf16.mxu0 %v367
    %524 = vmatpush1.bf16.msra.mxu0 %v366
    %525 = vmatprep.subr.bf16.mxu0 %v371
    %526 = vmatpush1.bf16.msra.mxu0 %v370
    %527 = vmatprep.subr.bf16.mxu0 %v375
    %528 = vmatpush1.bf16.msra.mxu0 %v374
    %529 = vmatprep.subr.bf16.mxu0 %v379
    %530 = vmatpush1.bf16.msra.mxu0 %v378
    %531 = vmatprep.subr.bf16.mxu0 %v383
    %532 = vmatpush1.bf16.msra.mxu0 %v382
    %533 = vmatprep.subr.bf16.mxu0 %v387
    %534 = vmatpush1.bf16.msra.mxu0 %v386
    %535 = vmatprep.subr.bf16.mxu0 %v391
    %536 = vmatpush1.bf16.msra.mxu0 %v390
    %537 = vmatprep.subr.bf16.mxu0 %v395
    %538 = vmatpush1.bf16.msra.mxu0 %v394
    %539 = vmatprep.subr.bf16.mxu0 %v399
    %540 = vmatpush1.bf16.msra.mxu0 %v398
    %541 = vmatprep.subr.bf16.mxu0 %v403
    %542 = vmatpush1.bf16.msra.mxu0 %v402
    %543 = vmatprep.subr.bf16.mxu0 %v407
    %544 = vmatpush1.bf16.msra.mxu0 %v406
    %545 = vmatprep.mubr.bf16.mxu0 %v149
    %546 = vmatmul.mubr.bf16.gmra.mrb[0].mxu0 %v148
    %v547 = vpop.f32.mrb[0].mxu0
    %v548 = vadd.f32 %v136, %v547
    %v549 = vpop.f32.mrb[0].mxu0
    %v550 = vadd.f32 %v140, %v549
    %v551 = vpop.f32.mrb[0].mxu0
    %v552 = vpop.f32.mrb[0].mxu0
    %553 = vdwg.mxu0
    %v554 = vxor.u32 %v507, 2147483648
    %v555 = vmul.f32 %v554, 1.442695
    %v556 = vpow.pop %v555
    %v557 = vadd.f32 %v556, 1.0
    %v558 = vrcp.pop %v557
    %v559 = vmul.f32 1.0, %v558
    %v560 = vxor.u32 %v509, 2147483648
    %v561 = vmul.f32 %v560, 1.442695
    %v562 = vpow.pop %v561
    %v563 = vadd.f32 %v562, 1.0
    %v564 = vrcp.pop %v563
    %v565 = vmul.f32 1.0, %v564
    %v566 = vtanh.pop %v548
    %v567 = vxor.u32 %v550, 2147483648
    %v568 = vmul.f32 %v567, 1.442695
    %v569 = vpow.pop %v568
    %v570 = vadd.f32 %v569, 1.0
    %v571 = vrcp.pop %v570
    %v572 = vmul.f32 1.0, %v571
    %v573 = vld [vmem:[#allocation5] sm:$0xff]
    %v574 = vmul.f32 %v573, %v565
    %v575 = vmul.f32 %v559, %v566
    %v576 = vadd.f32 %v574, %v575
    %v577 = vtanh.pop %v576
    %v578 = vmul.f32 %v572, %v577
    %579 = vst [vmem:[#allocation9] sm:$0xff] %v576
    %580 = vst [vmem:[#allocation8] sm:$0xff] %v578
    // Predicated region
    $region30: #{tpu_custom_call.1} parent=1 // pred_check
      _
    $region31: #{tpu_custom_call.1} parent=1 // pred_check_branch
      %582 = sbr.rel (0) target = $region33
    $region32: #{tpu_custom_call.1} parent=1 // pred_region
      %s584 = ssub.s32 128, 128
      %585 = vsyncadd [#allocation4], %s584
      %s587 = sshll.u32 [#allocation8], 4
      %s588 = int_to_ptr.vmem [resolvable:$true] %s587
      %590 = dma.vmem_to_hbm [thread:$0]  %s588, 128, %s4, [#allocation4]
    $region33: #{tpu_custom_call.1} parent=1 // pred_fallthru
      _
    // Predicated region
    $region34: #{tpu_custom_call.1} parent=1 // pred_check
      _
    $region35: #{tpu_custom_call.1} parent=1 // pred_check_branch
      %592 = sbr.rel (0) target = $region37
    $region36: #{tpu_custom_call.1} parent=1 // pred_region
      %s594 = ssub.s32 128, 128
      %595 = vsyncadd [#allocation10], %s594
      %s597 = sshll.u32 [#allocation9], 4
      %s598 = int_to_ptr.vmem [resolvable:$true] %s597
      %600 = dma.vmem_to_hbm [thread:$0]  %s598, 128, %s5, [#allocation10]
    $region37: #{tpu_custom_call.1} parent=1 // pred_fallthru
      _
    // Predicated region
    $region38: #{tpu_custom_call.1} parent=1 // pred_check
      _
    $region39: #{tpu_custom_call.1} parent=1 // pred_check_branch
      %602 = sbr.rel (0) target = $region41
    $region40: #{tpu_custom_call.1} parent=1 // pred_region
      %603 = dma.done [#allocation4], 128
    $region41: #{tpu_custom_call.1} parent=1 // pred_fallthru
      _
    // Predicated region
    $region42: #{tpu_custom_call.1} parent=1 // pred_check
      _
    $region43: #{tpu_custom_call.1} parent=1 // pred_check_branch
      %605 = sbr.rel (0) target = $region45
    $region44: #{tpu_custom_call.1} parent=1 // pred_region
      %606 = dma.done [#allocation10], 128
    $region45: #{tpu_custom_call.1} parent=1 // pred_fallthru
      _
    %607 = vsyncpa [#allocation3], 1
    %608 = vsyncpa [#allocation6], 1
    %609 = vsyncpa [#allocation4], 1
    %610 = vsyncpa [#allocation10], 1

</llo_original>
